<compile_context>
chip_gen: v7x
topology: tpu7x:2x2x1
jax: 0.10.0
libtpu: 0.0.40
codegen_flags: <defaults>
</compile_context>

<pallas_src>
import jax
import jax.numpy as jnp
from jax.experimental import pallas as pl
from jax.experimental.pallas import tpu as pltpu


# ---------------------------------------------------------------------------
# Planning helpers (all plain-Python, trace-time)
# ---------------------------------------------------------------------------

def _rup(a: int, b: int) -> int:
    """Round `a` up to a multiple of `b`."""
    return -(-a // b) * b


def _sublane_align(dtype_bytes: int) -> int:
    # Sublane packing factor: 8 (f32) / 16 (bf16) / 32 (int8 / fp8).
    return 8 * max(1, 4 // dtype_bytes)


def _legal_tcs(cpg: int, align: int):
    # Legal channel-tile extents: full cpg, or divisors of cpg that are a
    # multiple of the sublane packing factor (keeps the (8,128) block rule).
    return sorted({cpg} | {d for d in range(align, cpg, align) if cpg % d == 0})


def _plan_copy(N, g, cpg, HW, dtype_bytes, *, target_bytes, cap_bytes, min_steps=4):
    """Plan for the pure-copy path (requires HW % 128 == 0).

    Returns (nb, tc, thw, padded_footprint) or None.
    """
    align = _sublane_align(dtype_bytes)
    tcs = _legal_tcs(cpg, align)

    def footprint(nb, tc, thw):
        # in block (nb,1,tc,thw) and out block (nb,tc,thw) have identical
        # padded sizes (thw is a multiple of 128); 2x double-buffered each.
        return 4 * nb * _rup(tc, align) * thw * dtype_bytes

    def payload(nb, tc, thw):
        return nb * tc * thw * dtype_bytes

    def steps(nb, tc, thw):
        return (N // nb) * (cpg // tc) * g * (HW // thw)

    # Lane-axis tile: full HW if the smallest legal tc fits, else the largest
    # 128-multiple divisor of HW that fits the VMEM cap.
    thw = HW
    if footprint(1, tcs[0], HW) > cap_bytes:
        divs = [t for t in range(128, HW, 128)
                if HW % t == 0 and footprint(1, tcs[0], t) <= cap_bytes]
        if not divs:
            return None
        thw = max(divs)

    fitting = [t for t in tcs if footprint(1, t, thw) <= cap_bytes]
    under = [t for t in fitting if payload(1, t, thw) <= target_bytes]
    tc = max(under) if under else min(fitting)

    # Keep at least `min_steps` grid steps (megacore + pipeline depth).
    while steps(1, tc, thw) < min_steps:
        smaller = [t for t in fitting if t < tc]
        if not smaller:
            break
        tc = max(smaller)

    # Fold batch images into one block when a single image's slab is tiny
    # (single-TC chips are per-step-overhead bound on small payloads).
    nb = 1
    for cand in range(2, N + 1):
        if N % cand:
            continue
        if payload(cand, tc, thw) > target_bytes:
            break
        if footprint(cand, tc, thw) > cap_bytes:
            break
        if steps(cand, tc, thw) < min(min_steps, steps(1, tc, thw)):
            break
        nb = cand

    return nb, tc, thw, footprint(nb, tc, thw)


def _plan_swap(N, g, cpg, HW, dtype_bytes, *, target_bytes, cap_bytes, min_steps=4):
    """Plan for the swapaxes path (HW % 128 != 0).  Returns (nb, tc, fp) or None."""
    align = _sublane_align(dtype_bytes)
    tcs = _legal_tcs(cpg, align)
    lane_hw = _rup(HW, 128)

    def footprint(nb, tc):
        in_b = nb * g * _rup(tc, align) * lane_hw * dtype_bytes
        out_b = nb * tc * _rup(g, align) * lane_hw * dtype_bytes
        return 2 * (in_b + out_b)

    def payload(nb, tc):
        return nb * g * tc * HW * dtype_bytes

    def steps(nb, tc):
        return (N // nb) * (cpg // tc)

    fitting = [t for t in tcs if footprint(1, t) <= cap_bytes]
    if not fitting:
        return None
    under = [t for t in fitting if payload(1, t) <= target_bytes]
    tc = max(under) if under else min(fitting)

    while steps(1, tc) < min_steps:
        smaller = [t for t in fitting if t < tc]
        if not smaller:
            break
        tc = max(smaller)

    nb = 1
    for cand in range(2, N + 1):
        if N % cand:
            continue
        if payload(cand, tc) > target_bytes:
            break
        if footprint(cand, tc) > cap_bytes:
            break
        if steps(cand, tc) < min(min_steps, steps(1, tc)):
            break
        nb = cand

    return nb, tc, footprint(nb, tc)


def _vmem_limit(footprint_bytes: int) -> int:
    # Padded footprint + slack, never below the 32 MiB default, hard-capped
    # well under v7x's 64 MiB physical VMEM per TensorCore.
    return int(min(max(footprint_bytes + (4 << 20), 32 << 20), 56 << 20))


# ---------------------------------------------------------------------------
# Kernels
# ---------------------------------------------------------------------------

def _shuffle_copy_kernel(x_ref, o_ref):
    # Pure copy: the channel permutation lives entirely in the index_maps.
    # x_ref: (nb, 1, tc, thw)  ->  o_ref: (nb, tc, thw)
    o_ref[...] = x_ref[:, 0, :, :]


def _shuffle_swap_kernel(x_ref, o_ref):
    # g <-> cpg sublane relayout (XLU); used only when HW % 128 != 0.
    # x_ref: (nb, g, tc, HW)  ->  o_ref: (nb, tc, g, HW)
    o_ref[...] = jnp.swapaxes(x_ref[...], 1, 2)


# ---------------------------------------------------------------------------
# Public entry points
# ---------------------------------------------------------------------------

def channel_shuffle_ref(x: jax.Array, groups: int) -> jax.Array:
    """Pure-JAX reference mirroring the PyTorch view/permute/reshape."""
    N, C, H, W = x.shape
    g = groups
    return (x.reshape(N, g, C // g, H, W)
             .transpose(0, 2, 1, 3, 4)
             .reshape(N, C, H, W))


def channel_shuffle(x: jax.Array, groups: int, *,
                    target_step_bytes: int = 1 << 20,
                    vmem_cap_bytes: int = 48 << 20,
                    min_pallas_bytes: int = 2 << 20,
                    force_pallas: bool = False) -> jax.Array:
    """Pallas channel shuffle for NCHW input (ShuffleBlock forward)."""
    N, C, H, W = x.shape
    g = groups
    assert C % g == 0, "C must be divisible by groups"
    cpg = C // g
    if g == 1 or cpg == 1:
        return x  # shuffle is the identity

    HW = H * W
    dtype_bytes = jnp.dtype(x.dtype).itemsize
    total_bytes = N * C * HW * dtype_bytes

    # Tiny-input fast path: pallas_call launch + a 1-2 step grid is pure
    # overhead; XLA's fused transpose is already at roofline at this size.
    if total_bytes <= min_pallas_bytes and not force_pallas:
        return channel_shuffle_ref(x, g)

    x4 = x.reshape(N, g, cpg, HW)  # free metadata reshape (contiguous NCHW)

    if HW % 128 == 0:
        plan = _plan_copy(N, g, cpg, HW, dtype_bytes,
                          target_bytes=target_step_bytes,
                          cap_bytes=vmem_cap_bytes)
        if plan is not None:
            nb, tc, thw, fp = plan
            n_hw = HW // thw
            out3 = pl.pallas_call(
                _shuffle_copy_kernel,
                out_shape=jax.ShapeDtypeStruct((N, cpg, g * HW), x.dtype),
                grid_spec=pltpu.PrefetchScalarGridSpec(
                    num_scalar_prefetch=0,
                    grid=(N // nb, cpg // tc, g, n_hw),
                    in_specs=[pl.BlockSpec(
                        (nb, 1, tc, thw),
                        lambda n, t, gg, h: (n, gg, t, h))],
                    out_specs=pl.BlockSpec(
                        (nb, tc, thw),
                        lambda n, t, gg, h: (n, t, gg * n_hw + h)),
                ),
                compiler_params=pltpu.CompilerParams(
                    dimension_semantics=("parallel",) * 4,
                    vmem_limit_bytes=_vmem_limit(fp),
                ),
            )(x4)
            return out3.reshape(N, C, H, W)
    else:
        plan = _plan_swap(N, g, cpg, HW, dtype_bytes,
                          target_bytes=target_step_bytes,
                          cap_bytes=vmem_cap_bytes)
        if plan is not None:
            nb, tc, fp = plan
            out4 = pl.pallas_call(
                _shuffle_swap_kernel,
                out_shape=jax.ShapeDtypeStruct((N, cpg, g, HW), x.dtype),
                grid_spec=pltpu.PrefetchScalarGridSpec(
                    num_scalar_prefetch=0,
                    grid=(N // nb, cpg // tc),
                    in_specs=[pl.BlockSpec(
                        (nb, g, tc, HW), lambda n, t: (n, 0, t, 0))],
                    out_specs=pl.BlockSpec(
                        (nb, tc, g, HW), lambda n, t: (n, t, 0, 0)),
                ),
                compiler_params=pltpu.CompilerParams(
                    dimension_semantics=("parallel", "parallel"),
                    vmem_limit_bytes=_vmem_limit(fp),
                ),
            )(x4)
            return out4.reshape(N, C, H, W)

    # Nothing legal fits the VMEM cap (exotic shapes): let XLA handle it.
    return channel_shuffle_ref(x, g)


# ---------------------------------------------------------------------------
# Self-test
# ---------------------------------------------------------------------------

if __name__ == "__main__":
    key = jax.random.PRNGKey(0)
    k1, k2, k3, k4, k5 = jax.random.split(key, 5)

    # 1) Small shape consistent with ShuffleBlock(groups=4) inside BasicBlock,
    #    forced through the Pallas pure-copy path (HW = 256).
    x1 = jax.random.normal(k1, (2, 8, 16, 16), dtype=jnp.float32)
    o1 = jax.block_until_ready(channel_shuffle(x1, 4, force_pallas=True))
    assert o1.shape == x1.shape and o1.dtype == x1.dtype
    assert jnp.allclose(o1, channel_shuffle_ref(x1, 4)), "mismatch (f32 small)"

    # 2) Medium shape: goes through Pallas naturally (multi-step grid, tc < cpg,
    #    batch folding).
    x2 = jax.random.normal(k2, (2, 128, 64, 64), dtype=jnp.float32)
    o2 = jax.block_until_ready(channel_shuffle(x2, 4))
    assert jnp.allclose(o2, channel_shuffle_ref(x2, 4)), "mismatch (f32 medium)"

    # 3) Spatial size not a multiple of 128 (HW = 196): swapaxes path.
    x3 = jax.random.normal(k3, (2, 64, 14, 14), dtype=jnp.float32)
    o3 = jax.block_until_ready(channel_shuffle(x3, 4, force_pallas=True))
    assert jnp.allclose(o3, channel_shuffle_ref(x3, 4)), "mismatch (HW=196)"

    # 4) bf16 (packed sublane alignment).
    x4 = jax.random.normal(k4, (1, 32, 16, 16), dtype=jnp.bfloat16)
    o4 = jax.block_until_ready(channel_shuffle(x4, 4, force_pallas=True))
    assert (o4 == channel_shuffle_ref(x4, 4)).all(), "mismatch (bf16)"

    # 5) Lane-axis tiling fallback, forced via an artificially small VMEM cap.
    x5 = jax.random.normal(k5, (1, 32, 32, 32), dtype=jnp.float32)
    o5 = jax.block_until_ready(
        channel_shuffle(x5, 4, force_pallas=True, vmem_cap_bytes=48 << 10))
    assert jnp.allclose(o5, channel_shuffle_ref(x5, 4)), "mismatch (HW-tiled)"

    # 6) Tiny-input fast path (pure-JAX).
    o6 = jax.block_until_ready(channel_shuffle(x1, 4))
    assert jnp.allclose(o6, channel_shuffle_ref(x1, 4)), "mismatch (fast path)"

    print("KERNEL_OK")
</pallas_src>

<mosaic_0001>
module attributes {stable_mosaic.version = 11 : i64} {
  func.func @_shuffle_copy_kernel(%arg0: i32, %arg1: i32, %arg2: i32, %arg3: i32, %arg4: memref<2x1x2x256xf32, #tpu.memory_space<vmem>>, %arg5: memref<2x2x256xf32, #tpu.memory_space<vmem>>) attributes {dimension_semantics = [#tpu.dimension_semantics<parallel>, #tpu.dimension_semantics<parallel>, #tpu.dimension_semantics<parallel>, #tpu.dimension_semantics<parallel>], iteration_bounds = array<i64: 1, 1, 4, 1>, scalar_prefetch = 0 : i64, scratch_operands = 0 : i64, tpu.core_type = #tpu.core_type<tc>, window_params = [{transform_indices = @transform_0, window_bounds = array<i64: 2, 1, 2, 256>}, {transform_indices = @transform_1, window_bounds = array<i64: 2, 2, 256>}]} {
    %c0 = arith.constant 0 : index
    %c0_0 = arith.constant 0 : index
    %c0_1 = arith.constant 0 : index
    %c0_2 = arith.constant 0 : index
    %0 = vector.load %arg4[%c0, %c0_0, %c0_1, %c0_2] : memref<2x1x2x256xf32, #tpu.memory_space<vmem>>, vector<2x1x2x256xf32>
    %1 = vector.shape_cast %0 : vector<2x1x2x256xf32> to vector<2x2x256xf32>
    %c0_3 = arith.constant 0 : index
    %c0_4 = arith.constant 0 : index
    %c0_5 = arith.constant 0 : index
    %2 = vector.load %arg5[%c0_3, %c0_4, %c0_5] : memref<2x2x256xf32, #tpu.memory_space<vmem>>, vector<2x2x256xf32>
    tpu.vector_store %arg5[%c0_3, %c0_4, %c0_5], %1 {strides = array<i32>} : memref<2x2x256xf32, #tpu.memory_space<vmem>>, vector<2x2x256xf32>,
    return
  }
  func.func @transform_0(%arg0: i32, %arg1: i32, %arg2: i32, %arg3: i32) -> (i32, i32, i32, i32) {
    %c0_i32 = arith.constant 0 : i32
    return %arg0, %arg2, %arg1, %arg3 : i32, i32, i32, i32
  }
  func.func @transform_1(%arg0: i32, %arg1: i32, %arg2: i32, %arg3: i32) -> (i32, i32, i32) {
    %c1_i32 = arith.constant 1 : i32
    %0 = arith.muli %arg2, %c1_i32 : i32
    %1 = arith.addi %0, %arg3 : i32
    %c0_i32 = arith.constant 0 : i32
    return %arg0, %arg1, %1 : i32, i32, i32
  }
}

</mosaic_0001>

<llo_original>
// kernel: tpu_custom_call.1
$region0: #{tpu_custom_call.1}
  #allocation0 [shape = 'u32[]', space=smem, size = 0x4, offset = 0x4, fixed_abs, tag = 'smem constant byte address 0x4 - core index']
  #allocation1 [shape = 'u32[144,128]{1,0:T(1,128)}', space=vmem, size = 0x12000, scoped, tag = 'internal scratch']
  %s0 = inlined_call_operand.hbm [shape: f32[2,4,2,256], index: 0, kind: input, shape index: {}]
  %s1 = inlined_call_operand.hbm [shape: f32[2,2,1024], index: 1, kind: output, shape index: {}]
  %s2 = sld [smem:[#allocation0]]
  $region41: #{tpu_custom_call.1} parent=0
    _
  %s4 = ssub.s32 1, %s2
  %s5 = scalar_select 0, %s4, %s2
  $region1: #{tpu_custom_call.1} parent=0
    #allocation2 [shape = 'u8[8192]{0}', space=vmem, size = 0x2000, scoped, tag = 'input window, operand 0']
    #allocation3 [shape = 's32[2]{0}', space=sflag, size = 0x8, scoped, tag = 'scoped memory for tpu_custom_call.1']
    #allocation4 [shape = 's32[2]{0}', space=sflag, size = 0x8, scoped, tag = 'scoped memory for tpu_custom_call.1']
    #allocation5 [shape = 'u8[8192]{0}', space=vmem, size = 0x2000, scoped, tag = 'output window, operand 0']
    %6 = vsyncpa [#allocation3], 0
    %s7 = scalar_lea.sflag [#allocation3], 1
    %8 = vsyncpa %s7, 0
    %9 = vsyncpa [#allocation4], 0
    %s10 = scalar_lea.sflag [#allocation4], 1
    %11 = vsyncpa %s10, 0
    loop: start=0, step=1, limit=6
    $region2: #{tpu_custom_call.1} parent=1 // loop_pre_header
      _
    $region3: #{tpu_custom_call.1} parent=1 // loop_header
      %s13 = sphi 0, %s17
      %p14 = scmp.ge.s32.totalorder %s13, 6
      %s20 = sphi 0, %s46
      %s21 = sphi 0, %s42
      %s22 = sphi 0, %s38
      %s23 = sphi 0, %s34
      %s24 = sphi 0, %s20
      %s25 = sphi 0, %s21
      %s26 = sphi 0, %s22
      %s27 = sphi 0, %s23
      %s28 = sphi 0, %s24
      %s29 = sphi 0, %s25
      %s30 = sphi 0, %s26
      %s31 = sphi 0, %s27
      %s55 = sphi 0, %s57
      %s58 = sphi 0, %s55
      %s59 = sphi 0, %s58
      %s75 = sphi 0, %s59
      %s87 = sphi 0, %s89
      %s90 = sphi 0, %s87
      %s91 = sphi 0, %s90
      %s107 = sphi 0, %s91
    $region4: #{tpu_custom_call.1} parent=1 // loop_header_branch
      %16 = sbr.rel (%p14) target = $region8
    $region5: #{tpu_custom_call.1} parent=1 // loop_body
      %s18 = ssub.s32 %s13, 1
      %s19 = ssub.s32 %s13, 2
      %s32 = sadd.s32 1, %s23
      %p33 = scmp.ge.s32.totalorder %s32, 1
      %s34 = scalar_select %p33, 0, %s32
      %s35 = sadd.s32 1, %s22
      %s36 = scalar_select %p33, %s35, %s22
      %p37 = scmp.ge.s32.totalorder %s36, 4
      %s38 = scalar_select %p37, 0, %s36
      %s39 = sadd.s32 1, %s21
      %s40 = scalar_select %p37, %s39, %s21
      %p41 = scmp.ge.s32.totalorder %s40, 1
      %s42 = scalar_select %p41, 0, %s40
      %s43 = sadd.s32 1, %s20
      %s44 = scalar_select %p41, %s43, %s20
      %p45 = scmp.ge.s32.totalorder %s44, 1
      %s46 = scalar_select %p45, 0, %s44
      %s47 = ssub.s32 %s20, %s46
      %s48 = ssub.s32 %s22, %s38
      %s49 = sor.u32 %s47, %s48
      %s50 = ssub.s32 %s21, %s42
      %s51 = sor.u32 %s49, %s50
      %s52 = ssub.s32 %s23, %s34
      %s53 = sor.u32 %s51, %s52
      %p54 = scmp.eq.s32.totalorder %s53, 0
      %s56 = sadd.s32 %s55, 1
      %s57 = scalar_select %p54, %s55, %s56
      %p60 = pneg %p54
      %p61 = scmp.eq.s32.totalorder %s13, 3
      %p62 = por %p60, %p61
      %p63 = scmp.ne.s32.totalorder %s55, %s58
      %p64 = scmp.eq.s32.totalorder %s13, 0
      %p65 = por %p63, %p64
      %p66 = scmp.ne.s32.totalorder %s55, %s58
      %p67 = scmp.eq.s32.totalorder %s18, 3
      %p68 = por %p66, %p67
      %p69 = scmp.ne.s32.totalorder %s58, %s59
      %p70 = scmp.eq.s32.totalorder %s18, 0
      %p71 = por %p69, %p70
      %p72 = scmp.ne.s32.totalorder %s58, %s59
      %p73 = scmp.eq.s32.totalorder %s19, 3
      %p74 = por %p72, %p73
      %p76 = scmp.ne.s32.totalorder %s59, %s75
      %p77 = scmp.eq.s32.totalorder %s19, 0
      %p78 = por %p76, %p77
      %s79 = sadd.s32 %s22, %s23
      %s80 = sadd.s32 %s38, %s34
      %s81 = ssub.s32 %s20, %s46
      %s82 = ssub.s32 %s21, %s42
      %s83 = sor.u32 %s81, %s82
      %s84 = ssub.s32 %s79, %s80
      %s85 = sor.u32 %s83, %s84
      %p86 = scmp.eq.s32.totalorder %s85, 0
      %s88 = sadd.s32 %s87, 1
      %s89 = scalar_select %p86, %s87, %s88
      %p92 = pneg %p86
      %p93 = scmp.eq.s32.totalorder %s13, 3
      %p94 = por %p92, %p93
      %p95 = scmp.ne.s32.totalorder %s87, %s90
      %p96 = scmp.eq.s32.totalorder %s13, 0
      %p97 = por %p95, %p96
      %p98 = scmp.ne.s32.totalorder %s87, %s90
      %p99 = scmp.eq.s32.totalorder %s18, 3
      %p100 = por %p98, %p99
      %p101 = scmp.ne.s32.totalorder %s90, %s91
      %p102 = scmp.eq.s32.totalorder %s18, 0
      %p103 = por %p101, %p102
      %p104 = scmp.ne.s32.totalorder %s90, %s91
      %p105 = scmp.eq.s32.totalorder %s19, 3
      %p106 = por %p104, %p105
      %p108 = scmp.ne.s32.totalorder %s91, %s107
      %p109 = scmp.eq.s32.totalorder %s19, 0
      %p110 = por %p108, %p109
      %p111 = scmp.le.s32.totalorder 1, %s13
      %p112 = scmp.lt.s32.totalorder %s13, 5
      %p113 = pnand %p111, %p112
      %p114 = pneg %p113
      // Predicated region
      $region9: #{tpu_custom_call.1} parent=5 // pred_check
        _
      $region10: #{tpu_custom_call.1} parent=5 // pred_check_branch
        %116 = sbr.rel (%p113) target = $region12
      $region11: #{tpu_custom_call.1} parent=5 // pred_region
        %s117 = ssub.s32 %s13, 1
      $region12: #{tpu_custom_call.1} parent=5 // pred_fallthru
        _
      %p118 = scmp.lt.s32.totalorder %s13, 4
      // Predicated region
      $region13: #{tpu_custom_call.1} parent=5 // pred_check
        %p119 = pneg %p118
      $region14: #{tpu_custom_call.1} parent=5 // pred_check_branch
        %121 = sbr.rel (%p119) target = $region16
      $region15: #{tpu_custom_call.1} parent=5 // pred_region
        // Predicated region
        $region17: #{tpu_custom_call.1} parent=15 // pred_check
          %p122 = pneg %p65
        $region18: #{tpu_custom_call.1} parent=15 // pred_check_branch
          %124 = sbr.rel (%p122) target = $region20
        $region19: #{tpu_custom_call.1} parent=15 // pred_region
          %s125 = sand.u32 %s55, 1
          %s126 = scalar_lea.sflag [#allocation3], %s125
          %s127 = sand.u32 %s55, 1
          %s128 = smul.addr %s127, 8
          %s129 = scalar_lea.vmem [#allocation2], %s128
          %s130 = smul.u32 2, %s20
          %s131 = smul.u32 2, %s23
          %s133 = ssub.s32 128, 128
          %134 = vsyncadd %s126, %s133
          %s135 = smul.addr %s21, 2
          %s136 = sadd.s32 %s131, %s135
          %s137 = smul.addr %s22, 2
          %s138 = sadd.s32 %s136, %s137
          %s139 = smul.addr %s130, 8
          %s140 = sadd.s32 %s138, %s139
          %s141 = smul.addr %s140, 32
          %s142 = scalar_lea.hbm %s0, %s141
          %s143 = sshll.u32 %s129, 4
          %s144 = int_to_ptr.vmem [resolvable:$true] %s143
          %149 = dma.hbm_to_vmem [thread:$0]  %s142, 128, %s144, %s126, 256, 64, 4
        $region20: #{tpu_custom_call.1} parent=15 // pred_fallthru
          _
      $region16: #{tpu_custom_call.1} parent=5 // pred_fallthru
        _
      %p150 = scmp.le.s32.totalorder 1, %s13
      %p151 = scmp.lt.s32.totalorder %s13, 5
      %p152 = pnand %p150, %p151
      %p153 = pneg %p152
      // Predicated region
      $region21: #{tpu_custom_call.1} parent=5 // pred_check
        _
      $region22: #{tpu_custom_call.1} parent=5 // pred_check_branch
        %155 = sbr.rel (%p152) target = $region24
      $region23: #{tpu_custom_call.1} parent=5 // pred_region
        %s156 = ssub.s32 %s13, 1
        %s157 = sand.u32 %s58, 1
        %s158 = scalar_lea.sflag [#allocation3], %s157
        %s159 = sand.u32 %s58, 1
        %s160 = smul.addr %s159, 8
        %s161 = scalar_lea.vmem [#allocation2], %s160
        // Predicated region
        $region25: #{tpu_custom_call.1} parent=23 // pred_check
          %p162 = pneg %p71
        $region26: #{tpu_custom_call.1} parent=23 // pred_check_branch
          %164 = sbr.rel (%p162) target = $region28
        $region27: #{tpu_custom_call.1} parent=23 // pred_region
          %165 = dma.done %s158, 128
        $region28: #{tpu_custom_call.1} parent=23 // pred_fallthru
          _
        %s166 = sand.u32 %s58, 1
        %s167 = scalar_lea.sflag [#allocation3], %s166
        %s168 = sand.u32 %s58, 1
        %s169 = smul.addr %s168, 8
        %s170 = scalar_lea.vmem [#allocation2], %s169
        %p171 = pneg %p71
        %p172 = pneg %p68
        %p173 = pneg %p103
        %p174 = pneg %p100
        %s175 = sand.u32 %s90, 1
        %s176 = scalar_lea.sflag [#allocation4], %s175
        %s177 = sand.u32 %s90, 1
        %s178 = smul.addr %s177, 8
        %s179 = scalar_lea.vmem [#allocation5], %s178
        %s180 = smul.u32 2, %s24
        %s181 = smul.u32 2, %s27
        %s182 = sadd.s32 %s26, %s27
        %s183 = smul.u32 2, %s24
        %s184 = smul.u32 2, %s182
        %v185 = vld [vmem:[%s161] sm:$0xf]
        %v186 = vld [vmem:[%s161 + $0x4] sm:$0xf]
        %187 = vst [vmem:[%s179] sm:$0xf] %v185
        %188 = vst [vmem:[%s179 + $0x4] sm:$0xf] %v186
        %s189 = sand.u32 %s90, 1
        %s190 = scalar_lea.sflag [#allocation4], %s189
        %s191 = sand.u32 %s90, 1
        %s192 = smul.addr %s191, 8
        %s193 = scalar_lea.vmem [#allocation5], %s192
        // Predicated region
        $region29: #{tpu_custom_call.1} parent=23 // pred_check
          %p194 = pneg %p100
        $region30: #{tpu_custom_call.1} parent=23 // pred_check_branch
          %196 = sbr.rel (%p194) target = $region32
        $region31: #{tpu_custom_call.1} parent=23 // pred_region
          %s197 = sadd.s32 %s26, %s27
          %s198 = smul.u32 2, %s24
          %s199 = smul.u32 2, %s197
          %s201 = ssub.s32 128, 128
          %202 = vsyncadd %s190, %s201
          %s203 = smul.addr %s25, 8
          %s204 = sadd.s32 %s199, %s203
          %s205 = smul.addr %s198, 8
          %s206 = sadd.s32 %s204, %s205
          %s207 = smul.addr %s206, 32
          %s208 = scalar_lea.hbm %s1, %s207
          %s209 = sshll.u32 %s193, 4
          %s210 = int_to_ptr.vmem [resolvable:$true] %s209
          %215 = dma.vmem_to_hbm [thread:$0]  %s210, 128, %s208, %s190, 64, 256, 4
        $region32: #{tpu_custom_call.1} parent=23 // pred_fallthru
          _
      $region24: #{tpu_custom_call.1} parent=5 // pred_fallthru
        _
      %p216 = scmp.le.s32.totalorder 2, %s13
      // Predicated region
      $region33: #{tpu_custom_call.1} parent=5 // pred_check
        %p217 = pneg %p216
      $region34: #{tpu_custom_call.1} parent=5 // pred_check_branch
        %219 = sbr.rel (%p217) target = $region36
      $region35: #{tpu_custom_call.1} parent=5 // pred_region
        %s220 = ssub.s32 %s13, 2
        // Predicated region
        $region37: #{tpu_custom_call.1} parent=35 // pred_check
          %p221 = pneg %p106
        $region38: #{tpu_custom_call.1} parent=35 // pred_check_branch
          %223 = sbr.rel (%p221) target = $region40
        $region39: #{tpu_custom_call.1} parent=35 // pred_region
          %s224 = sand.u32 %s91, 1
          %s225 = scalar_lea.sflag [#allocation4], %s224
          %s226 = sand.u32 %s91, 1
          %s227 = smul.addr %s226, 8
          %s228 = scalar_lea.vmem [#allocation5], %s227
          %229 = dma.done %s225, 128
        $region40: #{tpu_custom_call.1} parent=35 // pred_fallthru
          _
      $region36: #{tpu_custom_call.1} parent=5 // pred_fallthru
        _
    $region6: #{tpu_custom_call.1} parent=1 // loop_footer
      %s17 = sadd.s32 1, %s13
    $region7: #{tpu_custom_call.1} parent=1 // loop_footer_branch
      %12 = sbr.rel target = $region3
    $region8: #{tpu_custom_call.1} parent=1 // loop_exit
      _
    %230 = vsyncpa [#allocation3], 1
    %s231 = scalar_lea.sflag [#allocation3], 1
    %232 = vsyncpa %s231, 1
    %233 = vsyncpa [#allocation4], 1
    %s234 = scalar_lea.sflag [#allocation4], 1
    %235 = vsyncpa %s234, 1

</llo_original>
